<compile_context>
chip_gen: v7x
topology: tpu7x:2x2x1
jax: 0.10.0
libtpu: 0.0.40
codegen_flags: <defaults>
</compile_context>

<pallas_src>
import jax
import jax.numpy as jnp
from jax.experimental import pallas as pl
from jax.experimental.pallas import tpu as pltpu


def _round_up(x, m):
    return ((x + m - 1) // m) * m


def _round_down(x, m):
    return (x // m) * m


# ---------------------------------------------------------------------------
# Kernel bodies
# ---------------------------------------------------------------------------

def _linreg_kernel_vpu(x_ref, w_ref, b_ref, o_ref):
    # x_ref: (TB, F) VMEM; w_ref: (1, F) VMEM; b_ref: (1,) SMEM f32; o_ref: (1, TB).
    # Small F: VPU multiply in the input dtype + f32-accumulated lane reduce.
    prod = x_ref[...] * w_ref[...]
    row = jnp.sum(prod, axis=-1, dtype=jnp.float32)                   # (TB,)
    o_ref[...] = (row[None, :] + b_ref[0]).astype(o_ref.dtype)        # lane-dense store


def _linreg_kernel_mxu(x_ref, w_ref, b_ref, o_ref):
    # x_ref: (TB, F) VMEM; w_ref: (F, 128) VMEM (weights in column 0, rest zero);
    # b_ref: (1,) SMEM f32; o_ref: (1, TB).
    # Moderate/large F: the MXU absorbs the reduction (it is idle otherwise), which
    # keeps the kernel HBM-bound at v7x's per-TC feed rate. Columns 1..127 of the
    # padded weight are exact zeros, so the lane sum of the MXU result == column 0.
    acc = jnp.dot(x_ref[...], w_ref[...], preferred_element_type=jnp.float32)  # (TB,128)
    row = jnp.sum(acc, axis=-1)                                        # (TB,) f32
    o_ref[...] = (row[None, :] + b_ref[0]).astype(o_ref.dtype)


# ---------------------------------------------------------------------------
# Tiling helpers
# ---------------------------------------------------------------------------

def _vmem_caps():
    """(physical VMEM capacity, budget for the double-buffered x pair), in bytes."""
    try:
        cap = int(pltpu.get_tpu_info().vmem_capacity_bytes)
    except Exception:
        cap = 64 << 20                      # conservative (v7x-sized) default
    if cap >= (100 << 20):                  # v5e / v6e: 128 MiB physical VMEM
        return cap, 64 << 20
    return cap, 24 << 20                    # v7x: 64 MiB physical, 32 MiB scoped default


def _choose_batch_tile(batch, row_bytes, per_buf_budget, tb_cap=None):
    """Lane-aligned (multiple of 128) batch tile sized by padded-VMEM bytes.

    Targets `per_buf_budget` bytes of footprint per x buffer, never exceeds the
    batch extent (so input blocks never exceed the array dim), and prefers >= 4
    grid steps (megacore) as long as each tile keeps >= ~1 MiB of footprint.
    """
    batch_cap = max(128, _round_down(batch, 128))
    tb = max(128, _round_down(per_buf_budget // row_bytes, 128))
    tb = min(tb, batch_cap)
    min_rows = max(128, _round_up(pl.cdiv(1 << 20, row_bytes), 128))
    split = max(128, min_rows, _round_up(pl.cdiv(batch, 4), 128))
    tb = min(tb, split)
    if tb_cap is not None:
        tb = min(tb, max(128, _round_down(tb_cap, 128)))
    return tb


# ---------------------------------------------------------------------------
# Forward wrapper
# ---------------------------------------------------------------------------

def linear_regression_forward(x, weight, bias, *, tb_cap=None, mxu_min_features=128):
    """x: (B, F); weight: (1, F) (PyTorch nn.Linear layout); bias: (1,) -> (B, 1)."""
    B, F = x.shape
    assert weight.shape == (1, F)
    dtype = x.dtype
    itemsize = jnp.dtype(dtype).itemsize
    f_lanes = _round_up(F, 128)              # lane-padded VMEM footprint of one row
    row_bytes = f_lanes * itemsize

    cap, pair_budget = _vmem_caps()
    use_mxu = F >= mxu_min_features

    weight = weight.astype(dtype)
    if use_mxu:
        # One-time tiny pad of the weight to an (F, 128) column block for the MXU.
        w_op = jnp.zeros((F, 128), dtype).at[:, 0].set(weight[0])
        w_spec = pl.BlockSpec((F, 128), lambda i: (0, 0))
        w_bytes = F * 128 * itemsize
        kernel = _linreg_kernel_mxu
    else:
        # TODO(synk): for F < 128 a lane-packing layout (reshape to 128-wide rows +
        # segmented reduce) would recover the 4x lane padding waste; not implemented.
        w_op = weight
        w_spec = pl.BlockSpec((1, F), lambda i: (0, 0))
        w_bytes = f_lanes * itemsize
        kernel = _linreg_kernel_vpu
    bias_s = bias.reshape(1).astype(jnp.float32)    # scalar operand for SMEM

    if B < 128:
        # Tiny batch: single full-array block (block shape == array shape satisfies
        # the (8,128) rule); perf is irrelevant at this size.
        tb = B
        num_tiles = 1
    else:
        tb = _choose_batch_tile(B, row_bytes, pair_budget // 2, tb_cap)
        num_tiles = pl.cdiv(B, tb)          # ragged last block handled by Pallas
    out_lanes = num_tiles * tb              # output padded only in its (tiny) lane dim

    # TODO(synk): no F (reduction-axis) tiling — for extremely wide features
    # (F_pad ~> 20k) the (128, F) double-buffered block would exceed VMEM; out of
    # scope for a 1-output regression head.
    resident = (2 * tb * row_bytes            # double-buffered x tiles
                + 2 * w_bytes                 # double-buffered (tiny) weight
                + 2 * _round_up(tb, 128) * itemsize)   # output blocks
    vmem_limit = int(min(resident + (8 << 20), cap * 3 // 4))
    vmem_limit = max(vmem_limit, resident + (2 << 20))

    out = pl.pallas_call(
        kernel,
        out_shape=jax.ShapeDtypeStruct((1, out_lanes), dtype),
        grid=(num_tiles,),
        in_specs=[
            pl.BlockSpec((tb, F), lambda i: (i, 0)),            # streamed x tiles
            w_spec,                                             # resident weight
            pl.BlockSpec(memory_space=pltpu.MemorySpace.SMEM),  # bias scalar
        ],
        out_specs=pl.BlockSpec((1, tb), lambda i: (0, i)),      # lane-dense output
        compiler_params=pltpu.CompilerParams(
            dimension_semantics=("parallel",),   # batch tiles shard across v7x's 2 TCs
            vmem_limit_bytes=vmem_limit,
        ),
        cost_estimate=pl.CostEstimate(
            flops=2 * B * F,
            transcendentals=0,
            bytes_accessed=itemsize * (B * F + F + B),
        ),
    )(x, w_op, bias_s)

    return out[0, :B].reshape(B, 1)


# Regularization terms (tiny scalar reductions over the parameters) — plain JAX glue,
# matching the module's l1_regularization / l2_regularization methods.
def l1_regularization(weight, bias, ratio):
    return (jnp.abs(weight).sum() + jnp.abs(bias).sum()) * ratio


def l2_regularization(weight, bias, ratio):
    return (jnp.square(weight).sum() + jnp.square(bias).sum()) * ratio


if __name__ == "__main__":
    key = jax.random.PRNGKey(0)

    def run_case(B, F, tol=1e-5, **kwargs):
        kx, kw, kb = jax.random.split(jax.random.fold_in(key, B * 1000 + F), 3)
        # Deterministic init mimicking nn.Linear default: U(-1/sqrt(F), 1/sqrt(F))
        bound = 1.0 / jnp.sqrt(jnp.float32(F))
        weight = jax.random.uniform(kw, (1, F), jnp.float32, -bound, bound)
        bias = jax.random.uniform(kb, (1,), jnp.float32, -bound, bound)
        x = jax.random.normal(kx, (B, F), jnp.float32)

        out = jax.block_until_ready(
            linear_regression_forward(x, weight, bias, **kwargs))

        ref = jnp.sum(x * weight, axis=-1, keepdims=True) + bias
        assert out.shape == (B, 1), (out.shape, B)
        assert jnp.allclose(out, ref, atol=tol, rtol=tol), (B, F)
        return weight, bias

    # Small shape consistent with nn.Linear(in_features=32, 1): full-block path.
    weight, bias = run_case(8, 32)
    # Multi-tile VPU path, ragged (non-128-multiple) batch, no wrapper pad of x.
    run_case(300, 96)
    # MXU reduction path (F >= 128), multiple batch tiles + ragged last tile.
    # tb_cap forces >1 tile at this small size; tolerance loosened in case the MXU
    # matmul uses reduced-precision passes for f32 operands.
    run_case(600, 256, tol=2e-2, tb_cap=256)

    # Exercise the regularization helpers too (scalar values).
    _ = jax.block_until_ready(l1_regularization(weight, bias, 0.01))
    _ = jax.block_until_ready(l2_regularization(weight, bias, 0.01))

    # TODO(synk): training loop / MSE loss / optimizer / DataLoader from the original
    # file are host-side training utilities with no Pallas forward-pass equivalent.
    print("KERNEL_OK")
</pallas_src>

<mosaic_0001>
module attributes {stable_mosaic.version = 11 : i64} {
  func.func @_linreg_kernel_vpu(%arg0: i32, %arg1: memref<8x32xf32, #tpu.memory_space<vmem>>, %arg2: memref<1x32xf32, #tpu.memory_space<vmem>>, %arg3: memref<1xf32, #tpu.memory_space<smem>>, %arg4: memref<1x8xf32, #tpu.memory_space<vmem>>) attributes {dimension_semantics = [#tpu.dimension_semantics<parallel>], iteration_bounds = array<i64: 1>, scalar_prefetch = 0 : i64, scratch_operands = 0 : i64, tpu.core_type = #tpu.core_type<tc>, window_params = [{transform_indices = @transform_0, window_bounds = array<i64: 8, 32>}, {pipeline_mode = #tpu.pipeline_mode<synchronous>, transform_indices = @transform_1, window_bounds = array<i64: 1, 32>}, {transform_indices = @transform_2, window_bounds = array<i64: 1>}, {transform_indices = @transform_3, window_bounds = array<i64: 1, 8>}]} {
    %c0 = arith.constant 0 : index
    %c0_0 = arith.constant 0 : index
    %0 = vector.load %arg1[%c0, %c0_0] : memref<8x32xf32, #tpu.memory_space<vmem>>, vector<8x32xf32>
    %c0_1 = arith.constant 0 : index
    %c0_2 = arith.constant 0 : index
    %1 = vector.load %arg2[%c0_1, %c0_2] : memref<1x32xf32, #tpu.memory_space<vmem>>, vector<1x32xf32>
    %2 = vector.broadcast %1 : vector<1x32xf32> to vector<8x32xf32>
    %3 = arith.mulf %0, %2 : vector<8x32xf32>
    %cst = arith.constant dense<0.000000e+00> : vector<8xf32>
    %4 = vector.multi_reduction <add>, %3, %cst [1] : vector<8x32xf32> to vector<8xf32>
    %5 = vector.shape_cast %4 : vector<8xf32> to vector<1x8xf32>
    %c0_3 = arith.constant 0 : index
    %6 = memref.load %arg3[%c0_3] : memref<1xf32, #tpu.memory_space<smem>>
    %7 = vector.broadcast %6 : f32 to vector<1x8xf32>
    %8 = arith.addf %5, %7 : vector<1x8xf32>
    %c0_4 = arith.constant 0 : index
    %c0_5 = arith.constant 0 : index
    %9 = vector.load %arg4[%c0_4, %c0_5] : memref<1x8xf32, #tpu.memory_space<vmem>>, vector<1x8xf32>
    tpu.vector_store %arg4[%c0_4, %c0_5], %8 {strides = array<i32>} : memref<1x8xf32, #tpu.memory_space<vmem>>, vector<1x8xf32>,
    return
  }
  func.func @transform_0(%arg0: i32) -> (i32, i32) {
    %c0_i32 = arith.constant 0 : i32
    %c0_i32_0 = arith.constant 0 : i32
    return %arg0, %c0_i32 : i32, i32
  }
  func.func @transform_1(%arg0: i32) -> (i32, i32) {
    %c0_i32 = arith.constant 0 : i32
    %c0_i32_0 = arith.constant 0 : i32
    %c0_i32_1 = arith.constant 0 : i32
    return %c0_i32, %c0_i32_0 : i32, i32
  }
  func.func @transform_2(%arg0: i32) -> i32 {
    %c0_i32 = arith.constant 0 : i32
    %c0_i32_0 = arith.constant 0 : i32
    return %c0_i32 : i32
  }
  func.func @transform_3(%arg0: i32) -> (i32, i32) {
    %c0_i32 = arith.constant 0 : i32
    %c0_i32_0 = arith.constant 0 : i32
    return %c0_i32, %arg0 : i32, i32
  }
}

</mosaic_0001>

<llo_original>
// kernel: tpu_custom_call.1
$region0: #{tpu_custom_call.1}
  #allocation0 [shape = 'u32[]', space=smem, size = 0x4, offset = 0x4, fixed_abs, tag = 'smem constant byte address 0x4 - core index']
  #allocation1 [shape = 'u32[144,128]{1,0:T(1,128)}', space=vmem, size = 0x12000, scoped, tag = 'internal scratch']
  #allocation2 [shape = 'f32[1]{0:T(128)S(6)}', space=smem, size = 0x200, scoped, tag = 'scoped memory for tpu_custom_call.1']
  %s0 = inlined_call_operand.hbm [shape: f32[8,32], index: 0, kind: input, shape index: {}]
  %s1 = inlined_call_operand.vmem [shape: f32[1,32], index: 1, kind: input, shape index: {}]
  %s2 = inlined_call_operand.<no memory space> [shape: f32[1], index: 2, kind: input, shape index: {}]
  %s3 = inlined_call_operand.hbm [shape: f32[1,8], index: 3, kind: output, shape index: {}]
  %s4 = sld [smem:[#allocation0]]
  $region26: #{tpu_custom_call.1} parent=0
    _
  %s6 = ssub.s32 1, %s4
  %s7 = scalar_select 0, %s6, %s4
  %8 = sst [smem:[#allocation2]] %s2
  $region1: #{tpu_custom_call.1} parent=0
    #allocation3 [shape = 'u8[4096]{0}', space=vmem, size = 0x1000, scoped, tag = 'input window, operand 0, single buffered']
    #allocation4 [shape = 's32[1]{0}', space=sflag, size = 0x4, scoped, tag = 'scoped memory for tpu_custom_call.1']
    #allocation5 [shape = 's32[1]{0}', space=sflag, size = 0x4, scoped, tag = 'scoped memory for tpu_custom_call.1']
    #allocation6 [shape = 'u8[512]{0}', space=vmem, size = 0x400, scoped, tag = 'output window, operand 0, single buffered']
    %9 = vsyncpa [#allocation4], 0
    %10 = vsyncpa [#allocation5], 0
    // Predicated region
    $region2: #{tpu_custom_call.1} parent=1 // pred_check
      _
    $region3: #{tpu_custom_call.1} parent=1 // pred_check_branch
      %12 = sbr.rel (0) target = $region5
    $region4: #{tpu_custom_call.1} parent=1 // pred_region
      %s14 = ssub.s32 128, 128
      %15 = vsyncadd [#allocation4], %s14
      %s17 = sshll.u32 [#allocation3], 4
      %s18 = int_to_ptr.vmem [resolvable:$true] %s17
      %20 = dma.hbm_to_vmem [thread:$0]  %s0, 128, %s18, [#allocation4]
    $region5: #{tpu_custom_call.1} parent=1 // pred_fallthru
      _
    // Predicated region
    $region6: #{tpu_custom_call.1} parent=1 // pred_check
      _
    $region7: #{tpu_custom_call.1} parent=1 // pred_check_branch
      %22 = sbr.rel (0) target = $region9
    $region8: #{tpu_custom_call.1} parent=1 // pred_region
      _
    $region9: #{tpu_custom_call.1} parent=1 // pred_fallthru
      _
    // Predicated region
    $region10: #{tpu_custom_call.1} parent=1 // pred_check
      _
    $region11: #{tpu_custom_call.1} parent=1 // pred_check_branch
      %24 = sbr.rel (0) target = $region13
    $region12: #{tpu_custom_call.1} parent=1 // pred_region
      _
    $region13: #{tpu_custom_call.1} parent=1 // pred_fallthru
      _
    // Predicated region
    $region14: #{tpu_custom_call.1} parent=1 // pred_check
      _
    $region15: #{tpu_custom_call.1} parent=1 // pred_check_branch
      %26 = sbr.rel (0) target = $region17
    $region16: #{tpu_custom_call.1} parent=1 // pred_region
      %27 = dma.done [#allocation4], 128
    $region17: #{tpu_custom_call.1} parent=1 // pred_fallthru
      _
    %v28 = vld [vmem:[#allocation3] sm:$0xff]
    %v29 = vld [vmem:[%s1] sm:$0x1]
    %v31 = vlaneseq
    %v32 = vshrl.u32 %v31, 7
    %v33 = vsub.s32 0, %v32
    %v34 = vrot.slane %v29, %v33
    %v36 = vmul.f32 %v28, %v34
    %vm37 = vcmask 261120
    %v38 = vsel %vm37, %v36, 0.0
    %39 = vadd.xlane.f32.xlu0 %v38
    %v40 = vpop.xlane.xlu0 %39
    %s41 = sld [smem:[#allocation2]]
    %v42 = vstv %s41
    %v43 = vadd.f32 %v40, %v42
    %v45 = vlaneseq
    %v46 = vand.u32 %v45, 127
    %v47 = vlaneseq
    %v48 = vshrl.u32 %v47, 7
    %v49 = vsub.s32 %v46, %v48
    %v50 = vrot.slane %v43, %v49
    %vm52 = vcmask 57344
    %53 = vst.msk [vmem:[#allocation6] sm:$0x1] %vm52, %v50
    // Predicated region
    $region18: #{tpu_custom_call.1} parent=1 // pred_check
      _
    $region19: #{tpu_custom_call.1} parent=1 // pred_check_branch
      %55 = sbr.rel (0) target = $region21
    $region20: #{tpu_custom_call.1} parent=1 // pred_region
      %s57 = ssub.s32 16, 16
      %58 = vsyncadd [#allocation5], %s57
      %s60 = sshll.u32 [#allocation6], 4
      %s61 = int_to_ptr.vmem [resolvable:$true] %s60
      %63 = dma.vmem_to_hbm [thread:$0]  %s61, 16, %s3, [#allocation5]
    $region21: #{tpu_custom_call.1} parent=1 // pred_fallthru
      _
    // Predicated region
    $region22: #{tpu_custom_call.1} parent=1 // pred_check
      _
    $region23: #{tpu_custom_call.1} parent=1 // pred_check_branch
      %65 = sbr.rel (0) target = $region25
    $region24: #{tpu_custom_call.1} parent=1 // pred_region
      %66 = dma.done [#allocation5], 16
    $region25: #{tpu_custom_call.1} parent=1 // pred_fallthru
      _
    %67 = vsyncpa [#allocation4], 1
    %68 = vsyncpa [#allocation5], 1

</llo_original>
